<compile_context>
chip_gen: v5e
topology: v5e:2x2
jax: 0.10.0
libtpu: 0.0.40
codegen_flags: <defaults>
</compile_context>

<pallas_src>
import jax
import jax.numpy as jnp
from jax.experimental import pallas as pl
from jax.experimental.pallas import tpu as pltpu


# Above this input width the kernel switches the one-hot / W1 to bf16 for the
# first matmul (exact for the one-hot; halves its VMEM footprint).
_BF16_D_THRESHOLD = 1024


def policy_kernel(s_ref, w1_ref, b1_ref, w2_ref, b2_ref, w3_ref, b3_ref,
                  out_ref):
    # s_ref : [1, TB] int32 state indices (batch on the lane axis).
    # w*    : [out, in] (PyTorch layout), b* : [out, 1].
    # out_ref: [2*Na, TB]  (rows 0:Na = logits, rows Na:2*Na = probs).
    tb = s_ref.shape[1]
    d_in = w1_ref.shape[1]

    states = s_ref[...]                                              # [1, TB]

    # linear1(one_hot(state)) == gather of W1 columns, realised as an in-VMEM
    # one-hot matmul on the MXU (no one-hot ever touches HBM).
    # TODO(synk): for very large grids (D in the many thousands) replace this
    # with a W1-column gather (jnp.take on the VMEM ref or a manual DMA
    # gather) to drop the [D, TB] intermediate entirely.
    row_ids = jax.lax.broadcasted_iota(jnp.int32, (d_in, tb), 0)     # [D, TB]
    onehot_mask = row_ids == states                                  # [D, TB]

    if d_in >= _BF16_D_THRESHOLD:
        # bf16-native MXU path for large grids: one-hot is exact in bf16 and
        # the [D, TB] intermediate shrinks 2x; accumulation stays f32.
        onehot = onehot_mask.astype(jnp.bfloat16)
        w1 = w1_ref[...].astype(jnp.bfloat16)
    else:
        onehot = onehot_mask.astype(jnp.float32)
        w1 = w1_ref[...]

    # linear1 + ReLU
    h1 = jnp.dot(w1, onehot, preferred_element_type=jnp.float32)
    h1 = jnp.maximum(h1 + b1_ref[...], 0.0)                          # [32, TB]

    # linear2 + ReLU
    h2 = jnp.dot(w2_ref[...], h1, preferred_element_type=jnp.float32)
    h2 = jnp.maximum(h2 + b2_ref[...], 0.0)                          # [16, TB]

    # linear3 -> logits
    logits = jnp.dot(w3_ref[...], h2, preferred_element_type=jnp.float32)
    logits = logits + b3_ref[...]                                    # [Na, TB]

    # Numerically stable softmax over the action axis (axis 0 here).  Exact
    # division: probs sum to 1 to float precision (no approx reciprocal).
    m = jnp.max(logits, axis=0, keepdims=True)
    e = jnp.exp(logits - m)
    probs = e / jnp.sum(e, axis=0, keepdims=True)

    # Pack logits + probs into one [2*Na, TB] slab: a single dense store per
    # grid step instead of two sublane-masked stores.
    out_ref[...] = jnp.concatenate([logits, probs], axis=0)


def _round_up(x, m):
    return (x + m - 1) // m * m


def _vmem_planning():
    """Returns (scoped-VMEM limit to request, planning budget for the tile)."""
    try:
        cap = int(pltpu.get_tpu_info().vmem_capacity_bytes)
    except Exception:
        # Fallback: assume the smallest per-TensorCore VMEM (v7x, 64 MiB).
        cap = 64 << 20
    limit = min(cap // 2, 64 << 20)   # comfortably under physical on any chip
    budget = (limit * 3) // 4         # headroom for weights + I/O buffers
    return limit, budget


def _choose_tile(B, D, vmem_budget):
    """Pick the batch tile (lanes per grid step) and the padded batch size."""
    b128 = _round_up(max(B, 1), 128)
    # Per-lane VMEM bytes: the [D, TB] one-hot dominates (counted at f32 even
    # on the bf16 path, as headroom); ~1 KiB/lane covers activations, the
    # double-buffered states and the packed [2*Na, TB] output.
    bytes_per_lane = 4 * D + 1024
    tb_cap = (vmem_budget // bytes_per_lane) // 128 * 128
    tb_cap = max(128, min(tb_cap, 8192))
    tb = min(tb_cap, b128)
    # Keep >= 2 grid steps when there is enough batch so the "parallel" batch
    # axis can be sharded across v7x's 2 TensorCores (megacore).
    if b128 >= 256 and b128 <= tb:
        tb = _round_up(pl.cdiv(b128, 2), 128)
    b_pad = _round_up(b128, tb)
    return tb, b_pad


def _resident_spec(shape, single_buffer):
    # Constant index_map -> the block never changes across the grid; these
    # weights/biases stay VMEM-resident.  With single_buffer=True the
    # (redundant) second pipeline buffer is dropped — opt-in because
    # Buffered(1) support varies across JAX versions.
    if single_buffer:
        return pl.BlockSpec(shape, lambda i: (0, 0),
                            pipeline_mode=pl.Buffered(1))
    return pl.BlockSpec(shape, lambda i: (0, 0))


def _policy_forward_jax(states, params):
    """Pure-JAX reference path (also used for tiny batches, where kernel
    launch / pad / transpose overhead would dominate)."""
    D = params["w1"].shape[1]
    x = jax.nn.one_hot(states, D, dtype=jnp.float32)
    h1 = jnp.maximum(x @ params["w1"].T + params["b1"][:, 0], 0.0)
    h2 = jnp.maximum(h1 @ params["w2"].T + params["b2"][:, 0], 0.0)
    logits = h2 @ params["w3"].T + params["b3"][:, 0]
    return logits, jax.nn.softmax(logits, axis=1)


def policy_forward(states, params, tb=None, small_batch_threshold=0,
                   single_buffer_weights=False):
    """states: [B] int32 grid-state indices.  Returns (logits, probs), [B, Na]."""
    B = states.shape[0]
    n_h1, D = params["w1"].shape
    n_h2 = params["w2"].shape[0]
    Na = params["w3"].shape[0]

    if B < small_batch_threshold:
        # Tiny rollout batches: skip the kernel entirely.
        return _policy_forward_jax(states, params)

    vmem_limit, vmem_budget = _vmem_planning()
    if tb is None:
        tb, b_pad = _choose_tile(B, D, vmem_budget)
    else:
        tb = _round_up(tb, 128)
        b_pad = _round_up(max(B, tb), tb)

    # Pad the batch to a whole number of tiles (padded lanes compute valid
    # state-0 garbage that is sliced off below).  jnp.pad avoids an extra
    # full-size scatter pass over the batch.
    s2d = jnp.pad(states.astype(jnp.int32).reshape(1, -1),
                  ((0, 0), (0, b_pad - B)))

    resident = lambda shape: _resident_spec(shape, single_buffer_weights)

    packed = pl.pallas_call(
        policy_kernel,
        out_shape=jax.ShapeDtypeStruct((2 * Na, b_pad), jnp.float32),
        grid=(b_pad // tb,),
        in_specs=[
            pl.BlockSpec((1, tb), lambda i: (0, i)),   # state indices
            resident((n_h1, D)),                       # w1
            resident((n_h1, 1)),                       # b1
            resident((n_h2, n_h1)),                    # w2
            resident((n_h2, 1)),                       # b2
            resident((Na, n_h2)),                      # w3
            resident((Na, 1)),                         # b3
        ],
        out_specs=pl.BlockSpec((2 * Na, tb), lambda i: (0, i)),
        compiler_params=pltpu.CompilerParams(
            dimension_semantics=("parallel",),
            vmem_limit_bytes=int(vmem_limit)),
    )(s2d, params["w1"], params["b1"], params["w2"], params["b2"],
      params["w3"], params["b3"])

    # Back to the module's [B, Na] convention (tiny transpose outside kernel).
    logits = packed[:Na, :B].T
    probs = packed[Na:, :B].T
    return logits, probs


def init_params(key, d_in, na):
    """nn.Linear-style init (uniform +/- 1/sqrt(fan_in)), PyTorch [out, in]."""
    ks = jax.random.split(key, 6)

    def lin(kw, kb, fan_in, fan_out):
        bound = 1.0 / jnp.sqrt(float(fan_in))
        w = jax.random.uniform(kw, (fan_out, fan_in), jnp.float32, -bound, bound)
        b = jax.random.uniform(kb, (fan_out, 1), jnp.float32, -bound, bound)
        return w, b

    w1, b1 = lin(ks[0], ks[1], d_in, 32)
    w2, b2 = lin(ks[2], ks[3], 32, 16)
    w3, b3 = lin(ks[4], ks[5], 16, na)
    return {"w1": w1, "b1": b1, "w2": w2, "b2": b2, "w3": w3, "b3": b3}


if __name__ == "__main__":
    # Small env: Nx=4, Ny=4 grid (D=16), Na=4 actions, batch of 2 scalar states.
    Nx, Ny, Na = 4, 4, 4
    B = 2
    D = Ny * Nx

    key = jax.random.PRNGKey(0)
    k_params, k_states, k_sample = jax.random.split(key, 3)

    params = init_params(k_params, D, Na)

    # "x is an iterable of scalar" -> batch of scalar grid-state indices.
    # TODO(synk): the real env.representation is environment-specific; a
    # one-hot grid encoding of the scalar state index is assumed here and
    # folded into the kernel as a one-hot x W1 matmul.
    states = jax.random.randint(k_states, (B,), 0, D)

    logits, probs = policy_forward(states, params)

    # distributions.Categorical(softmax(logits)).sample([1]).squeeze()
    action = jax.random.categorical(k_sample, logits, axis=1)        # [B]

    action, logits, probs = jax.block_until_ready((action, logits, probs))

    # Pure-JAX reference (one-hot x, PyTorch-style x @ W.T + b).
    ref_logits, ref_probs = _policy_forward_jax(states, params)

    assert logits.shape == (B, Na) and probs.shape == (B, Na)
    assert jnp.allclose(logits, ref_logits, atol=1e-5, rtol=1e-5)
    # Exact-division softmax in the kernel -> tight tolerances.
    assert jnp.allclose(probs, ref_probs, atol=1e-5, rtol=1e-5)
    assert jnp.allclose(jnp.sum(probs, axis=1), 1.0, atol=1e-5)
    assert action.shape == (B,)

    print("KERNEL_OK")
</pallas_src>

<mosaic_0001>
module attributes {stable_mosaic.version = 11 : i64} {
  func.func @policy_kernel(%arg0: i32, %arg1: memref<1x128xi32, #tpu.memory_space<vmem>>, %arg2: memref<32x16xf32, #tpu.memory_space<vmem>>, %arg3: memref<32x1xf32, #tpu.memory_space<vmem>>, %arg4: memref<16x32xf32, #tpu.memory_space<vmem>>, %arg5: memref<16x1xf32, #tpu.memory_space<vmem>>, %arg6: memref<4x16xf32, #tpu.memory_space<vmem>>, %arg7: memref<4x1xf32, #tpu.memory_space<vmem>>, %arg8: memref<8x128xf32, #tpu.memory_space<vmem>>) attributes {dimension_semantics = [#tpu.dimension_semantics<parallel>], iteration_bounds = array<i64: 1>, scalar_prefetch = 0 : i64, scratch_operands = 0 : i64, tpu.core_type = #tpu.core_type<tc>, window_params = [{transform_indices = @transform_0, window_bounds = array<i64: 1, 128>}, {pipeline_mode = #tpu.pipeline_mode<synchronous>, transform_indices = @transform_1, window_bounds = array<i64: 32, 16>}, {pipeline_mode = #tpu.pipeline_mode<synchronous>, transform_indices = @transform_2, window_bounds = array<i64: 32, 1>}, {pipeline_mode = #tpu.pipeline_mode<synchronous>, transform_indices = @transform_3, window_bounds = array<i64: 16, 32>}, {pipeline_mode = #tpu.pipeline_mode<synchronous>, transform_indices = @transform_4, window_bounds = array<i64: 16, 1>}, {pipeline_mode = #tpu.pipeline_mode<synchronous>, transform_indices = @transform_5, window_bounds = array<i64: 4, 16>}, {pipeline_mode = #tpu.pipeline_mode<synchronous>, transform_indices = @transform_6, window_bounds = array<i64: 4, 1>}, {transform_indices = @transform_7, window_bounds = array<i64: 8, 128>}]} {
    %c0 = arith.constant 0 : index
    %c0_0 = arith.constant 0 : index
    %0 = vector.load %arg1[%c0, %c0_0] : memref<1x128xi32, #tpu.memory_space<vmem>>, vector<1x128xi32>
    %1 = tpu.iota {dimensions = array<i32: 0>} : vector<16x128xi32>
    %2 = vector.broadcast %0 : vector<1x128xi32> to vector<16x128xi32>
    %3 = arith.cmpi eq, %1, %2 : vector<16x128xi32>
    %4 = arith.extui %3 : vector<16x128xi1> to vector<16x128xi32>
    %5 = arith.sitofp %4 : vector<16x128xi32> to vector<16x128xf32>
    %c0_1 = arith.constant 0 : index
    %c0_2 = arith.constant 0 : index
    %6 = vector.load %arg2[%c0_1, %c0_2] : memref<32x16xf32, #tpu.memory_space<vmem>>, vector<32x16xf32>
    %cst = arith.constant dense<0.000000e+00> : vector<32x128xf32>
    %7 = tpu.matmul %6, %5, %cst {dimension_numbers = #tpu.dot_dimension_numbers<[1], [0], [0], [1], [0, 0, 1, 1], [], []>} : vector<32x16xf32>, vector<16x128xf32>, vector<32x128xf32> -> vector<32x128xf32>
    %c0_3 = arith.constant 0 : index
    %c0_4 = arith.constant 0 : index
    %8 = vector.load %arg3[%c0_3, %c0_4] : memref<32x1xf32, #tpu.memory_space<vmem>>, vector<32x1xf32>
    %9 = vector.broadcast %8 : vector<32x1xf32> to vector<32x128xf32>
    %10 = arith.addf %7, %9 : vector<32x128xf32>
    %cst_5 = arith.constant 0.000000e+00 : f32
    %11 = vector.broadcast %cst_5 : f32 to vector<32x128xf32>
    %12 = arith.maximumf %10, %11 : vector<32x128xf32>
    %c0_6 = arith.constant 0 : index
    %c0_7 = arith.constant 0 : index
    %13 = vector.load %arg4[%c0_6, %c0_7] : memref<16x32xf32, #tpu.memory_space<vmem>>, vector<16x32xf32>
    %cst_8 = arith.constant dense<0.000000e+00> : vector<16x128xf32>
    %14 = tpu.matmul %13, %12, %cst_8 {dimension_numbers = #tpu.dot_dimension_numbers<[1], [0], [0], [1], [0, 0, 1, 1], [], []>} : vector<16x32xf32>, vector<32x128xf32>, vector<16x128xf32> -> vector<16x128xf32>
    %c0_9 = arith.constant 0 : index
    %c0_10 = arith.constant 0 : index
    %15 = vector.load %arg5[%c0_9, %c0_10] : memref<16x1xf32, #tpu.memory_space<vmem>>, vector<16x1xf32>
    %16 = vector.broadcast %15 : vector<16x1xf32> to vector<16x128xf32>
    %17 = arith.addf %14, %16 : vector<16x128xf32>
    %cst_11 = arith.constant 0.000000e+00 : f32
    %18 = vector.broadcast %cst_11 : f32 to vector<16x128xf32>
    %19 = arith.maximumf %17, %18 : vector<16x128xf32>
    %c0_12 = arith.constant 0 : index
    %c0_13 = arith.constant 0 : index
    %20 = vector.load %arg6[%c0_12, %c0_13] : memref<4x16xf32, #tpu.memory_space<vmem>>, vector<4x16xf32>
    %cst_14 = arith.constant dense<0.000000e+00> : vector<4x128xf32>
    %21 = tpu.matmul %20, %19, %cst_14 {dimension_numbers = #tpu.dot_dimension_numbers<[1], [0], [0], [1], [0, 0, 1, 1], [], []>} : vector<4x16xf32>, vector<16x128xf32>, vector<4x128xf32> -> vector<4x128xf32>
    %c0_15 = arith.constant 0 : index
    %c0_16 = arith.constant 0 : index
    %22 = vector.load %arg7[%c0_15, %c0_16] : memref<4x1xf32, #tpu.memory_space<vmem>>, vector<4x1xf32>
    %23 = vector.broadcast %22 : vector<4x1xf32> to vector<4x128xf32>
    %24 = arith.addf %21, %23 : vector<4x128xf32>
    %cst_17 = arith.constant dense<0xFF800000> : vector<128xf32>
    %25 = vector.multi_reduction <maximumf>, %24, %cst_17 [0] : vector<4x128xf32> to vector<128xf32>
    %26 = vector.shape_cast %25 : vector<128xf32> to vector<1x128xf32>
    %27 = vector.broadcast %26 : vector<1x128xf32> to vector<4x128xf32>
    %28 = arith.subf %24, %27 : vector<4x128xf32>
    %29 = math.exp %28 : vector<4x128xf32>
    %cst_18 = arith.constant dense<0.000000e+00> : vector<128xf32>
    %30 = vector.multi_reduction <add>, %29, %cst_18 [0] : vector<4x128xf32> to vector<128xf32>
    %31 = vector.shape_cast %30 : vector<128xf32> to vector<1x128xf32>
    %32 = vector.broadcast %31 : vector<1x128xf32> to vector<4x128xf32>
    %33 = arith.divf %29, %32 : vector<4x128xf32>
    %34 = tpu.concatenate %24, %33 in 0 : vector<4x128xf32>, vector<4x128xf32> -> vector<8x128xf32>
    %c0_19 = arith.constant 0 : index
    %c0_20 = arith.constant 0 : index
    %35 = vector.load %arg8[%c0_19, %c0_20] : memref<8x128xf32, #tpu.memory_space<vmem>>, vector<8x128xf32>
    tpu.vector_store %arg8[%c0_19, %c0_20], %34 {strides = array<i32>} : memref<8x128xf32, #tpu.memory_space<vmem>>, vector<8x128xf32>,
    return
  }
  func.func @transform_0(%arg0: i32) -> (i32, i32) {
    %c0_i32 = arith.constant 0 : i32
    %c0_i32_0 = arith.constant 0 : i32
    return %c0_i32, %arg0 : i32, i32
  }
  func.func @transform_1(%arg0: i32) -> (i32, i32) {
    %c0_i32 = arith.constant 0 : i32
    %c0_i32_0 = arith.constant 0 : i32
    %c0_i32_1 = arith.constant 0 : i32
    return %c0_i32, %c0_i32_0 : i32, i32
  }
  func.func @transform_2(%arg0: i32) -> (i32, i32) {
    %c0_i32 = arith.constant 0 : i32
    %c0_i32_0 = arith.constant 0 : i32
    %c0_i32_1 = arith.constant 0 : i32
    return %c0_i32, %c0_i32_0 : i32, i32
  }
  func.func @transform_3(%arg0: i32) -> (i32, i32) {
    %c0_i32 = arith.constant 0 : i32
    %c0_i32_0 = arith.constant 0 : i32
    %c0_i32_1 = arith.constant 0 : i32
    return %c0_i32, %c0_i32_0 : i32, i32
  }
  func.func @transform_4(%arg0: i32) -> (i32, i32) {
    %c0_i32 = arith.constant 0 : i32
    %c0_i32_0 = arith.constant 0 : i32
    %c0_i32_1 = arith.constant 0 : i32
    return %c0_i32, %c0_i32_0 : i32, i32
  }
  func.func @transform_5(%arg0: i32) -> (i32, i32) {
    %c0_i32 = arith.constant 0 : i32
    %c0_i32_0 = arith.constant 0 : i32
    %c0_i32_1 = arith.constant 0 : i32
    return %c0_i32, %c0_i32_0 : i32, i32
  }
  func.func @transform_6(%arg0: i32) -> (i32, i32) {
    %c0_i32 = arith.constant 0 : i32
    %c0_i32_0 = arith.constant 0 : i32
    %c0_i32_1 = arith.constant 0 : i32
    return %c0_i32, %c0_i32_0 : i32, i32
  }
  func.func @transform_7(%arg0: i32) -> (i32, i32) {
    %c0_i32 = arith.constant 0 : i32
    %c0_i32_0 = arith.constant 0 : i32
    return %c0_i32, %arg0 : i32, i32
  }
}

</mosaic_0001>

<llo_original>
// kernel: tpu_custom_call.1
$region0: #{tpu_custom_call.1}
  #allocation0 [shape = 'u32[]', space=smem, size = 0x4, offset = 0x4, fixed_abs, tag = 'smem constant byte address 0x4 - core index']
  #allocation1 [shape = 'u32[72,128]{1,0:T(1,128)}', space=vmem, size = 0x9000, scoped, tag = 'internal scratch']
  %s0 = inlined_call_operand.vmem [shape: s32[1,128], index: 0, kind: input, shape index: {}]
  %s1 = inlined_call_operand.vmem [shape: f32[32,16], index: 1, kind: input, shape index: {}]
  %s2 = inlined_call_operand.vmem [shape: f32[32,1], index: 2, kind: input, shape index: {}]
  %s3 = inlined_call_operand.vmem [shape: f32[16,32], index: 3, kind: input, shape index: {}]
  %s4 = inlined_call_operand.vmem [shape: f32[16,1], index: 4, kind: input, shape index: {}]
  %s5 = inlined_call_operand.vmem [shape: f32[4,16], index: 5, kind: input, shape index: {}]
  %s6 = inlined_call_operand.vmem [shape: f32[4,1], index: 6, kind: input, shape index: {}]
  %s7 = inlined_call_operand.hbm [shape: f32[8,128], index: 7, kind: output, shape index: {}]
  %s8 = sld [smem:[#allocation0]]
  $region38: #{tpu_custom_call.1} parent=0
    _
  %s10 = ssub.s32 1, %s8
  %s11 = scalar_select 0, %s10, %s8
  $region1: #{tpu_custom_call.1} parent=0
    #allocation2 [shape = 'u8[4096]{0}', space=vmem, size = 0x1000, scoped, tag = 'output window, operand 0, single buffered']
    #allocation3 [shape = 's32[1]{0}', space=sflag, size = 0x4, scoped, tag = 'scoped memory for tpu_custom_call.1']
    %12 = vsyncpa [#allocation3], 0
    // Predicated region
    $region2: #{tpu_custom_call.1} parent=1 // pred_check
      _
    $region3: #{tpu_custom_call.1} parent=1 // pred_check_branch
      %14 = sbr.rel (0) target = $region5
    $region4: #{tpu_custom_call.1} parent=1 // pred_region
      _
    $region5: #{tpu_custom_call.1} parent=1 // pred_fallthru
      _
    // Predicated region
    $region6: #{tpu_custom_call.1} parent=1 // pred_check
      _
    $region7: #{tpu_custom_call.1} parent=1 // pred_check_branch
      %16 = sbr.rel (0) target = $region9
    $region8: #{tpu_custom_call.1} parent=1 // pred_region
      _
    $region9: #{tpu_custom_call.1} parent=1 // pred_fallthru
      _
    // Predicated region
    $region10: #{tpu_custom_call.1} parent=1 // pred_check
      _
    $region11: #{tpu_custom_call.1} parent=1 // pred_check_branch
      %18 = sbr.rel (0) target = $region13
    $region12: #{tpu_custom_call.1} parent=1 // pred_region
      _
    $region13: #{tpu_custom_call.1} parent=1 // pred_fallthru
      _
    // Predicated region
    $region14: #{tpu_custom_call.1} parent=1 // pred_check
      _
    $region15: #{tpu_custom_call.1} parent=1 // pred_check_branch
      %20 = sbr.rel (0) target = $region17
    $region16: #{tpu_custom_call.1} parent=1 // pred_region
      _
    $region17: #{tpu_custom_call.1} parent=1 // pred_fallthru
      _
    // Predicated region
    $region18: #{tpu_custom_call.1} parent=1 // pred_check
      _
    $region19: #{tpu_custom_call.1} parent=1 // pred_check_branch
      %22 = sbr.rel (0) target = $region21
    $region20: #{tpu_custom_call.1} parent=1 // pred_region
      _
    $region21: #{tpu_custom_call.1} parent=1 // pred_fallthru
      _
    // Predicated region
    $region22: #{tpu_custom_call.1} parent=1 // pred_check
      _
    $region23: #{tpu_custom_call.1} parent=1 // pred_check_branch
      %24 = sbr.rel (0) target = $region25
    $region24: #{tpu_custom_call.1} parent=1 // pred_region
      _
    $region25: #{tpu_custom_call.1} parent=1 // pred_fallthru
      _
    // Predicated region
    $region26: #{tpu_custom_call.1} parent=1 // pred_check
      _
    $region27: #{tpu_custom_call.1} parent=1 // pred_check_branch
      %26 = sbr.rel (0) target = $region29
    $region28: #{tpu_custom_call.1} parent=1 // pred_region
      _
    $region29: #{tpu_custom_call.1} parent=1 // pred_fallthru
      _
    %v27 = vld [vmem:[%s0] sm:$0x1]
    %v28 = vlaneseq
    %v29 = vshrl.u32 %v28, 7
    %v30 = vadd.s32 %v29, 8
    %v31 = vperm.slane %v27, 0
    %vm32 = vcmp.eq.s32.totalorder %v29, %v31
    %vm33 = vcmp.eq.s32.totalorder %v30, %v31
    %v34 = vsel %vm32, 1, 0
    %v35 = vsel %vm33, 1, 0
    %v36 = vcvt.s32.f32 %v34
    %v37 = vcvt.s32.f32 %v35
    %v38 = vld [vmem:[%s1] sm:$0xff]
    %v39 = vld [vmem:[%s1 + $0x8] sm:$0xff]
    %v40 = vld [vmem:[%s1 + $0x10] sm:$0xff]
    %v41 = vld [vmem:[%s1 + $0x18] sm:$0xff]
    %v42 = vld [vmem:[%s2] sm:$0xff]
    %v43 = vld [vmem:[%s2 + $0x8] sm:$0xff]
    %v44 = vld [vmem:[%s2 + $0x10] sm:$0xff]
    %v45 = vld [vmem:[%s2 + $0x18] sm:$0xff]
    %47 = vset.pattern.permute.xlu0 0
    %48 = vperm.xlu0 %47, %v42
    %v49 = vpop.permute.xlu0 %48
    %52 = vset.pattern.permute.xlu0 0
    %53 = vperm.xlu0 %52, %v43
    %v54 = vpop.permute.xlu0 %53
    %57 = vset.pattern.permute.xlu0 0
    %58 = vperm.xlu0 %57, %v44
    %v59 = vpop.permute.xlu0 %58
    %62 = vset.pattern.permute.xlu0 0
    %63 = vperm.xlu0 %62, %v45
    %v64 = vpop.permute.xlu0 %63
    %vm66 = vcmask 130048
    %v68 = vsel %vm66, %v38, 0
    %v71 = vsel %vm66, %v39, 0
    %v74 = vsel %vm66, %v40, 0
    %v77 = vsel %vm66, %v41, 0
    %79 = vmatpush.msra.mxu0 0.0
    %80 = vmatpush.msra.mxu0 0.0
    %81 = vmatpush.msra.mxu0 0.0
    %82 = vmatpush.msra.mxu0 0.0
    %83 = vmatpush.msra.mxu0 0.0
    %84 = vmatpush.msra.mxu0 0.0
    %85 = vmatpush.msra.mxu0 0.0
    %86 = vmatpush.msra.mxu0 0.0
    %87 = vmatpush.msra.mxu0 0.0
    %88 = vmatpush.msra.mxu0 0.0
    %89 = vmatpush.msra.mxu0 0.0
    %90 = vmatpush.msra.mxu0 0.0
    %91 = vmatpush.msra.mxu0 0.0
    %92 = vmatpush.msra.mxu0 0.0
    %93 = vmatpush.msra.mxu0 %v37
    %94 = vmatpush.msra.mxu0 %v36
    %95 = vmatmul.f32.gmra.mxu0 %v68
    %v96 = vpop.f32.mrf.mxu0
    %v97 = vadd.f32 %v49, %v96
    %98 = vmatmul.f32.gmra.mxu0 %v71
    %v99 = vpop.f32.mrf.mxu0
    %v100 = vadd.f32 %v54, %v99
    %101 = vmatmul.f32.gmra.mxu0 %v74
    %v102 = vpop.f32.mrf.mxu0
    %v103 = vadd.f32 %v59, %v102
    %104 = vmatmul.f32.gmra.mxu0 %v77
    %v105 = vpop.f32.mrf.mxu0
    %v106 = vadd.f32 %v64, %v105
    %107 = vdwg.mxu0
    %v108 = vmax.f32 %v97, 0.0
    %v109 = vmax.f32 %v100, 0.0
    %v110 = vmax.f32 %v103, 0.0
    %v111 = vmax.f32 %v106, 0.0
    %v112 = vld [vmem:[%s3] sm:$0xff]
    %v113 = vld [vmem:[%s3 + $0x8] sm:$0xff]
    %v114 = vld [vmem:[%s4] sm:$0xff]
    %v115 = vld [vmem:[%s4 + $0x8] sm:$0xff]
    %117 = vset.pattern.permute.xlu0 0
    %118 = vperm.xlu0 %117, %v114
    %v119 = vpop.permute.xlu0 %118
    %122 = vset.pattern.permute.xlu0 0
    %123 = vperm.xlu0 %122, %v115
    %v124 = vpop.permute.xlu0 %123
    %vm126 = vcmask 261120
    %v128 = vsel %vm126, %v112, 0
    %v131 = vsel %vm126, %v113, 0
    %133 = vmatpush.msra.mxu0 0.0
    %134 = vmatpush.msra.mxu0 0.0
    %135 = vmatpush.msra.mxu0 0.0
    %136 = vmatpush.msra.mxu0 0.0
    %137 = vmatpush.msra.mxu0 0.0
    %138 = vmatpush.msra.mxu0 0.0
    %139 = vmatpush.msra.mxu0 0.0
    %140 = vmatpush.msra.mxu0 0.0
    %141 = vmatpush.msra.mxu0 0.0
    %142 = vmatpush.msra.mxu0 0.0
    %143 = vmatpush.msra.mxu0 0.0
    %144 = vmatpush.msra.mxu0 0.0
    %145 = vmatpush.msra.mxu0 %v111
    %146 = vmatpush.msra.mxu0 %v110
    %147 = vmatpush.msra.mxu0 %v109
    %148 = vmatpush.msra.mxu0 %v108
    %149 = vmatmul.f32.gmra.mxu0 %v128
    %v150 = vpop.f32.mrf.mxu0
    %v151 = vadd.f32 %v119, %v150
    %152 = vmatmul.f32.gmra.mxu0 %v131
    %v153 = vpop.f32.mrf.mxu0
    %v154 = vadd.f32 %v124, %v153
    %155 = vdwg.mxu0
    %v156 = vmax.f32 %v151, 0.0
    %v157 = vmax.f32 %v154, 0.0
    %v158 = vld [vmem:[%s5] sm:$0xf]
    %v159 = vld [vmem:[%s6] sm:$0xf]
    %161 = vset.pattern.permute.xlu0 0
    %162 = vperm.xlu0 %161, %v159
    %v163 = vpop.permute.xlu0 %162
    %v166 = vsel %vm66, %v158, 0
    %168 = vmatpush.msra.mxu0 0.0
    %169 = vmatpush.msra.mxu0 0.0
    %170 = vmatpush.msra.mxu0 0.0
    %171 = vmatpush.msra.mxu0 0.0
    %172 = vmatpush.msra.mxu0 0.0
    %173 = vmatpush.msra.mxu0 0.0
    %174 = vmatpush.msra.mxu0 0.0
    %175 = vmatpush.msra.mxu0 0.0
    %176 = vmatpush.msra.mxu0 0.0
    %177 = vmatpush.msra.mxu0 0.0
    %178 = vmatpush.msra.mxu0 0.0
    %179 = vmatpush.msra.mxu0 0.0
    %180 = vmatpush.msra.mxu0 0.0
    %181 = vmatpush.msra.mxu0 0.0
    %182 = vmatpush.msra.mxu0 %v157
    %183 = vmatpush.msra.mxu0 %v156
    %184 = vmatmul.f32.gmra.mxu0 %v166
    %v185 = vpop.f32.mrf.mxu0
    %v186 = vadd.f32 %v163, %v185
    %187 = vdwg.mxu0
    %vm188 = vcmask 1043456
    %v189 = vsel %vm188, %v186, -inf
    %v190 = vrot.slane %v189, 4
    %v191 = vmax.f32 %v189, %v190
    %v192 = vrot.slane %v191, 2
    %v193 = vmax.f32 %v191, %v192
    %v194 = vrot.slane %v193, 1
    %v195 = vmax.f32 %v193, %v194
    %v196 = vsub.f32 %v186, %v195
    %v197 = vmul.f32 %v196, 1.442695
    %v198 = vpow.pop %v197
    %v199 = vsel %vm188, %v198, 0.0
    %v200 = vrot.slane %v199, 4
    %v201 = vadd.f32 %v199, %v200
    %v202 = vrot.slane %v201, 2
    %v203 = vadd.f32 %v201, %v202
    %v204 = vrot.slane %v203, 1
    %v205 = vadd.f32 %v203, %v204
    %v206 = vrcp.pop %v205
    %v207 = vmul.f32 %v205, %v206
    %v208 = vsub.f32 1.0, %v207
    %v209 = vmul.f32 %v206, %v208
    %v210 = vadd.f32 %v206, %v209
    %vm211 = vweird.f32 %v205
    %vm212 = vweird.f32 %v206
    %vm213 = vmor %vm211, %vm212
    %v214 = vsel %vm213, %v206, %v210
    %v215 = vand.u32 2147483647, %v205
    %vm216 = vcmp.eq.f32.partialorder %v215, 8.507059e+37
    %v217 = vand.u32 %v205, 2147483648
    %v218 = vor.u32 1.1754944e-38, %v217
    %v219 = vsel %vm216, %v218, %v214
    %v220 = vmul.f32 %v198, %v219
    %v222 = vrot.slane %v220, 4
    %v224 = vsel %vm188, %v186, %v222
    %225 = vst [vmem:[#allocation2] sm:$0xff] %v224
    // Predicated region
    $region30: #{tpu_custom_call.1} parent=1 // pred_check
      _
    $region31: #{tpu_custom_call.1} parent=1 // pred_check_branch
      %227 = sbr.rel (0) target = $region33
    $region32: #{tpu_custom_call.1} parent=1 // pred_region
      %229 = vsyncadd [#allocation3], 0
      %s231 = sshll.u32 [#allocation2], 4
      %s232 = int_to_ptr.vmem [resolvable:$true] %s231
      %s233 = sshll.u32 %s7, 4
      %s234 = int_to_ptr.hbm [resolvable:$true] %s233
      %236 = dma.vmem_to_hbm [thread:$0]  %s232, 128, %s234, [#allocation3]
    $region33: #{tpu_custom_call.1} parent=1 // pred_fallthru
      _
    // Predicated region
    $region34: #{tpu_custom_call.1} parent=1 // pred_check
      _
    $region35: #{tpu_custom_call.1} parent=1 // pred_check_branch
      %238 = sbr.rel (0) target = $region37
    $region36: #{tpu_custom_call.1} parent=1 // pred_region
      %240 = dma.done [#allocation3], 128
    $region37: #{tpu_custom_call.1} parent=1 // pred_fallthru
      _
    %241 = vsyncpa [#allocation3], 1

</llo_original>
